<compile_context>
chip_gen: v5e
topology: v5e:2x2
jax: 0.10.0
libtpu: 0.0.40
codegen_flags: <defaults>
</compile_context>

<pallas_src>
import jax
import jax.numpy as jnp
from jax import lax
from jax.experimental import pallas as pl
from jax.experimental.pallas import tpu as pltpu


def _maxpool2x2_kernel(x_ref, o_ref):
    """One grid step == one block of pooled output rows.

    x_ref : (TR, 2*W)  row r = [input row 2i | input row 2i+1] on the lane axis
    o_ref : (TR, Wo)   pooled output rows
    """
    W = x_ref.shape[-1] // 2
    Wo = o_ref.shape[-1]

    # Compute dtype / MXU precision: bf16 stays native (1-pass, exact selection
    # with f32 accumulation); f32 needs HIGHEST for the selection to be exact.
    if x_ref.dtype == jnp.bfloat16:
        cdt, prec = jnp.bfloat16, lax.Precision.DEFAULT
    else:
        cdt, prec = jnp.float32, lax.Precision.HIGHEST

    x = x_ref[...].astype(cdt)

    # Height pooling: the two pooled rows live in the two lane halves (VPU max).
    a = jnp.maximum(x[:, :W], x[:, W:])                     # (TR, W)

    # Width pooling, step 1: adjacent-lane max so every even column 2w holds
    # max(a[:, 2w], a[:, 2w+1]).  (XLU lane shift + VPU max.)
    m = jnp.maximum(a[:, : W - 1], a[:, 1:])                # (TR, W-1)

    # Width pooling, step 2: ONE exact 0/1 selection matmul picking the even
    # columns 0, 2, ..., 2*(Wo-1).  Built in-kernel -> no extra input stream,
    # no double-buffered VMEM copy.  (An odd trailing column is never picked.)
    k = W - 1
    src = lax.broadcasted_iota(jnp.int32, (k, Wo), 0)
    dst = lax.broadcasted_iota(jnp.int32, (k, Wo), 1)
    sel = (src == 2 * dst).astype(cdt)                      # (W-1, Wo)

    out = jnp.dot(m, sel, preferred_element_type=jnp.float32, precision=prec)
    o_ref[...] = out.astype(o_ref.dtype)


def maxpool2d_2x2_pallas(x, *, row_block=None):
    """nn.MaxPool2d(2, 2) for NCHW input: (N, C, H, W) -> (N, C, H//2, W//2)."""
    N, C, H, W = x.shape
    Ho, Wo = H // 2, W // 2
    if Ho == 0 or Wo == 0:
        return jnp.zeros((N, C, Ho, Wo), x.dtype)

    # Floor mode.  Odd W needs no crop (selection matrix skips the last column);
    # odd H does need one (rare; this slice is the only extra HBM copy).
    if H != 2 * Ho:
        x = x[:, :, : 2 * Ho, :]

    R = N * C * Ho                    # one kernel row per pooled output row
    x2 = x.reshape(R, 2 * W)          # free row-major reshape in HBM

    # Row tile: ~4 MiB of input per grid step (double-buffered by the pipeline),
    # sublane-aligned multiple of 8; a partial trailing block is handled by the
    # cdiv grid.
    if row_block is None:
        bytes_per_row = 2 * W * x2.dtype.itemsize
        row_block = max(8, (4 * 1024 * 1024) // max(1, bytes_per_row))
    tr = min(int(row_block), R)
    if tr < R:
        tr = max(8, (tr // 8) * 8)

    out2 = pl.pallas_call(
        _maxpool2x2_kernel,
        out_shape=jax.ShapeDtypeStruct((R, Wo), x.dtype),
        grid_spec=pltpu.PrefetchScalarGridSpec(
            num_scalar_prefetch=0,
            grid=(pl.cdiv(R, tr),),
            in_specs=[pl.BlockSpec((tr, 2 * W), lambda i: (i, 0))],
            out_specs=pl.BlockSpec((tr, Wo), lambda i: (i, 0)),
        ),
        compiler_params=pltpu.CompilerParams(
            dimension_semantics=("parallel",),
            # Explicit budget: 2 x ~4 MiB input + 2 x ~1 MiB output + in-kernel
            # temporaries.  48 MiB lifts v5e's 16 MiB default scoped limit while
            # staying inside v7x's 64 MiB physical VMEM.
            vmem_limit_bytes=48 * 1024 * 1024,
        ),
    )(x2)

    return out2.reshape(N, C, Ho, Wo)


def _reference_maxpool2x2(x):
    """Plain-JAX reference mirroring nn.MaxPool2d(2, 2) (floor mode)."""
    return lax.reduce_window(
        x, jnp.array(-jnp.inf, x.dtype), lax.max,
        window_dimensions=(1, 1, 2, 2),
        window_strides=(1, 1, 2, 2),
        padding="VALID")


if __name__ == "__main__":
    key = jax.random.PRNGKey(0)
    k1, k2, k3, k4 = jax.random.split(key, 4)

    # Small NCHW shapes consistent with the module's forward.
    cases = [
        (jax.random.normal(k1, (2, 4, 16, 16), jnp.float32), None),   # single block
        (jax.random.normal(k2, (2, 4, 16, 16), jnp.float32), 16),     # multi-step grid
        (jax.random.normal(k3, (1, 3, 17, 15), jnp.float32), None),   # odd H and W (floor)
        (jax.random.normal(k4, (2, 3, 10, 16), jnp.bfloat16), 8),     # bf16 + partial last block
    ]

    for xin, rb in cases:
        out = jax.block_until_ready(maxpool2d_2x2_pallas(xin, row_block=rb))
        ref = _reference_maxpool2x2(xin)
        assert out.shape == ref.shape, (out.shape, ref.shape)
        # bf16 path and f32-HIGHEST selection are (near-)exact; tight tolerance
        # catches any precision regression as well as structural errors.
        assert jnp.allclose(out.astype(jnp.float32), ref.astype(jnp.float32),
                            atol=1e-6, rtol=1e-6), "maxpool mismatch vs JAX reference"

    print("KERNEL_OK")
</pallas_src>

<mosaic_0001>
module attributes {stable_mosaic.version = 11 : i64} {
  func.func @_maxpool2x2_kernel(%arg0: i32, %arg1: memref<64x32xf32, #tpu.memory_space<vmem>>, %arg2: memref<64x8xf32, #tpu.memory_space<vmem>>) attributes {dimension_semantics = [#tpu.dimension_semantics<parallel>], iteration_bounds = array<i64: 1>, scalar_prefetch = 0 : i64, scratch_operands = 0 : i64, tpu.core_type = #tpu.core_type<tc>, window_params = [{transform_indices = @transform_0, window_bounds = array<i64: 64, 32>}, {transform_indices = @transform_1, window_bounds = array<i64: 64, 8>}]} {
    %c0 = arith.constant 0 : index
    %c0_0 = arith.constant 0 : index
    %0 = vector.load %arg1[%c0, %c0_0] : memref<64x32xf32, #tpu.memory_space<vmem>>, vector<64x32xf32>
    %1 = vector.extract_strided_slice %0 {offsets = [0, 0], sizes = [64, 16], strides = [1, 1]} : vector<64x32xf32> to vector<64x16xf32>
    %2 = vector.extract_strided_slice %0 {offsets = [0, 16], sizes = [64, 16], strides = [1, 1]} : vector<64x32xf32> to vector<64x16xf32>
    %3 = arith.maximumf %1, %2 : vector<64x16xf32>
    %4 = vector.extract_strided_slice %3 {offsets = [0, 0], sizes = [64, 15], strides = [1, 1]} : vector<64x16xf32> to vector<64x15xf32>
    %5 = vector.extract_strided_slice %3 {offsets = [0, 1], sizes = [64, 15], strides = [1, 1]} : vector<64x16xf32> to vector<64x15xf32>
    %6 = arith.maximumf %4, %5 : vector<64x15xf32>
    %7 = tpu.iota {dimensions = array<i32: 0>} : vector<15x8xi32>
    %8 = tpu.iota {dimensions = array<i32: 1>} : vector<15x8xi32>
    %c2_i32 = arith.constant 2 : i32
    %9 = vector.broadcast %c2_i32 : i32 to vector<15x8xi32>
    %10 = arith.muli %9, %8 : vector<15x8xi32>
    %11 = arith.cmpi eq, %7, %10 : vector<15x8xi32>
    %12 = arith.extui %11 : vector<15x8xi1> to vector<15x8xi32>
    %13 = arith.sitofp %12 : vector<15x8xi32> to vector<15x8xf32>
    %cst = arith.constant dense<0.000000e+00> : vector<64x8xf32>
    %14 = tpu.matmul %6, %13, %cst {dimension_numbers = #tpu.dot_dimension_numbers<[1], [0], [0], [1], [0, 0, 1, 1], [], []>, precision = #tpu.contract_precision<fp32>} : vector<64x15xf32>, vector<15x8xf32>, vector<64x8xf32> -> vector<64x8xf32>
    %c0_1 = arith.constant 0 : index
    %c0_2 = arith.constant 0 : index
    %15 = vector.load %arg2[%c0_1, %c0_2] : memref<64x8xf32, #tpu.memory_space<vmem>>, vector<64x8xf32>
    tpu.vector_store %arg2[%c0_1, %c0_2], %14 {strides = array<i32>} : memref<64x8xf32, #tpu.memory_space<vmem>>, vector<64x8xf32>,
    return
  }
  func.func @transform_0(%arg0: i32) -> (i32, i32) {
    %c0_i32 = arith.constant 0 : i32
    %c0_i32_0 = arith.constant 0 : i32
    return %arg0, %c0_i32 : i32, i32
  }
  func.func @transform_1(%arg0: i32) -> (i32, i32) {
    %c0_i32 = arith.constant 0 : i32
    %c0_i32_0 = arith.constant 0 : i32
    return %arg0, %c0_i32 : i32, i32
  }
}

</mosaic_0001>

<llo_original>
// kernel: tpu_custom_call.1
$region0: #{tpu_custom_call.1}
  #allocation0 [shape = 'u32[]', space=smem, size = 0x4, offset = 0x4, fixed_abs, tag = 'smem constant byte address 0x4 - core index']
  #allocation1 [shape = 'u32[72,128]{1,0:T(1,128)}', space=vmem, size = 0x9000, scoped, tag = 'internal scratch']
  %s0 = inlined_call_operand.vmem [shape: f32[64,32], index: 0, kind: input, shape index: {}]
  %s1 = inlined_call_operand.vmem [shape: f32[64,8], index: 1, kind: output, shape index: {}]
  %s2 = sld [smem:[#allocation0]]
  $region14: #{tpu_custom_call.1} parent=0
    _
  %s4 = ssub.s32 1, %s2
  %s5 = scalar_select 0, %s4, %s2
  // Predicated region
  $region2: #{tpu_custom_call.1} parent=0 // pred_check
    _
  $region3: #{tpu_custom_call.1} parent=0 // pred_check_branch
    %7 = sbr.rel (0) target = $region5
  $region4: #{tpu_custom_call.1} parent=0 // pred_region
    _
  $region5: #{tpu_custom_call.1} parent=0 // pred_fallthru
    _
  %v8 = vld [vmem:[%s0] sm:$0xff]
  %v9 = vld [vmem:[%s0 + $0x8] sm:$0xff]
  %v10 = vld [vmem:[%s0 + $0x10] sm:$0xff]
  %v11 = vld [vmem:[%s0 + $0x18] sm:$0xff]
  %v12 = vld [vmem:[%s0 + $0x20] sm:$0xff]
  %v13 = vld [vmem:[%s0 + $0x28] sm:$0xff]
  %v14 = vld [vmem:[%s0 + $0x30] sm:$0xff]
  %v15 = vld [vmem:[%s0 + $0x38] sm:$0xff]
  %24 = vrot.lane.b32.xlu0 %v8, 112
  %v25 = vpop.permute.xlu0 %24
  %26 = vrot.lane.b32.xlu0 %v9, 112
  %v27 = vpop.permute.xlu0 %26
  %28 = vrot.lane.b32.xlu0 %v10, 112
  %v29 = vpop.permute.xlu0 %28
  %30 = vrot.lane.b32.xlu0 %v11, 112
  %v31 = vpop.permute.xlu0 %30
  %32 = vrot.lane.b32.xlu0 %v12, 112
  %v33 = vpop.permute.xlu0 %32
  %34 = vrot.lane.b32.xlu0 %v13, 112
  %v35 = vpop.permute.xlu0 %34
  %36 = vrot.lane.b32.xlu0 %v14, 112
  %v37 = vpop.permute.xlu0 %36
  %38 = vrot.lane.b32.xlu0 %v15, 112
  %v39 = vpop.permute.xlu0 %38
  %v48 = vmax.f32 %v8, %v25
  %v49 = vmax.f32 %v9, %v27
  %v50 = vmax.f32 %v10, %v29
  %v51 = vmax.f32 %v11, %v31
  %v52 = vmax.f32 %v12, %v33
  %v53 = vmax.f32 %v13, %v35
  %v54 = vmax.f32 %v14, %v37
  %v55 = vmax.f32 %v15, %v39
  %64 = vrot.lane.b32.xlu0 %v48, 127
  %v65 = vpop.permute.xlu0 %64
  %66 = vrot.lane.b32.xlu0 %v49, 127
  %v67 = vpop.permute.xlu0 %66
  %68 = vrot.lane.b32.xlu0 %v50, 127
  %v69 = vpop.permute.xlu0 %68
  %70 = vrot.lane.b32.xlu0 %v51, 127
  %v71 = vpop.permute.xlu0 %70
  %72 = vrot.lane.b32.xlu0 %v52, 127
  %v73 = vpop.permute.xlu0 %72
  %74 = vrot.lane.b32.xlu0 %v53, 127
  %v75 = vpop.permute.xlu0 %74
  %76 = vrot.lane.b32.xlu0 %v54, 127
  %v77 = vpop.permute.xlu0 %76
  %78 = vrot.lane.b32.xlu0 %v55, 127
  %v79 = vpop.permute.xlu0 %78
  %v88 = vmax.f32 %v48, %v65
  %v89 = vmax.f32 %v49, %v67
  %v90 = vmax.f32 %v50, %v69
  %v91 = vmax.f32 %v51, %v71
  %v92 = vmax.f32 %v52, %v73
  %v93 = vmax.f32 %v53, %v75
  %v94 = vmax.f32 %v54, %v77
  %v95 = vmax.f32 %v55, %v79
  %v96 = vlaneseq
  %v97 = vshrl.u32 %v96, 7
  %v98 = vadd.s32 %v97, 8
  %v99 = vlaneseq
  %v100 = vand.u32 %v99, 127
  %v101 = vmul.u32 %v100, 2
  %vm102 = vcmp.eq.s32.totalorder %v97, %v101
  %vm103 = vcmp.eq.s32.totalorder %v98, %v101
  %v104 = vsel %vm102, 1, 0
  %v105 = vsel %vm103, 1, 0
  %v106 = vcvt.s32.f32 %v104
  %v107 = vcvt.s32.f32 %v105
  %vm108 = vcmask 121856
  %v110 = vsel %vm108, %v88, 0
  %v113 = vsel %vm108, %v89, 0
  %v116 = vsel %vm108, %v90, 0
  %v119 = vsel %vm108, %v91, 0
  %v122 = vsel %vm108, %v92, 0
  %v125 = vsel %vm108, %v93, 0
  %v128 = vsel %vm108, %v94, 0
  %v131 = vsel %vm108, %v95, 0
  %vm133 = vcmask 1046528
  %v135 = vsel %vm133, %v107, 0
  %137 = vmatpush.msra.mxu0 0.0
  %138 = vmatpush.msra.mxu0 0.0
  %139 = vmatpush.msra.mxu0 0.0
  %140 = vmatpush.msra.mxu0 0.0
  %141 = vmatpush.msra.mxu0 0.0
  %142 = vmatpush.msra.mxu0 0.0
  %143 = vmatpush.msra.mxu0 0.0
  %144 = vmatpush.msra.mxu0 0.0
  %145 = vmatpush.msra.mxu0 0.0
  %146 = vmatpush.msra.mxu0 0.0
  %147 = vmatpush.msra.mxu0 0.0
  %148 = vmatpush.msra.mxu0 0.0
  %149 = vmatpush.msra.mxu0 0.0
  %150 = vmatpush.msra.mxu0 0.0
  %v151 = vand.u32 %v135, 4294901760
  %152 = vmatpush.msra.mxu0 %v151
  %v153 = vand.u32 %v106, 4294901760
  %154 = vmatpush.msra.mxu0 %v153
  %v155 = vand.u32 %v110, 4294901760
  %v156 = vsub.f32 %v110, %v155
  %v157 = vand.u32 %v156, 4294901760
  %v158 = vsub.f32 %v156, %v157
  %v159 = vand.u32 %v158, 4294901760
  %160 = vmatmul.f32.gmra.mxu0 %v159
  %v161 = vpop.f32.mrf.mxu0
  %v162 = vadd.f32 0.0, %v161
  %v163 = vand.u32 %v113, 4294901760
  %v164 = vsub.f32 %v113, %v163
  %v165 = vand.u32 %v164, 4294901760
  %v166 = vsub.f32 %v164, %v165
  %v167 = vand.u32 %v166, 4294901760
  %168 = vmatmul.f32.gmra.mxu0 %v167
  %v169 = vpop.f32.mrf.mxu0
  %v170 = vadd.f32 0.0, %v169
  %v171 = vand.u32 %v116, 4294901760
  %v172 = vsub.f32 %v116, %v171
  %v173 = vand.u32 %v172, 4294901760
  %v174 = vsub.f32 %v172, %v173
  %v175 = vand.u32 %v174, 4294901760
  %176 = vmatmul.f32.gmra.mxu0 %v175
  %v177 = vpop.f32.mrf.mxu0
  %v178 = vadd.f32 0.0, %v177
  %v179 = vand.u32 %v119, 4294901760
  %v180 = vsub.f32 %v119, %v179
  %v181 = vand.u32 %v180, 4294901760
  %v182 = vsub.f32 %v180, %v181
  %v183 = vand.u32 %v182, 4294901760
  %184 = vmatmul.f32.gmra.mxu0 %v183
  %v185 = vpop.f32.mrf.mxu0
  %v186 = vadd.f32 0.0, %v185
  %v187 = vand.u32 %v122, 4294901760
  %v188 = vsub.f32 %v122, %v187
  %v189 = vand.u32 %v188, 4294901760
  %v190 = vsub.f32 %v188, %v189
  %v191 = vand.u32 %v190, 4294901760
  %192 = vmatmul.f32.gmra.mxu0 %v191
  %v193 = vpop.f32.mrf.mxu0
  %v194 = vadd.f32 0.0, %v193
  %v195 = vand.u32 %v125, 4294901760
  %v196 = vsub.f32 %v125, %v195
  %v197 = vand.u32 %v196, 4294901760
  %v198 = vsub.f32 %v196, %v197
  %v199 = vand.u32 %v198, 4294901760
  %200 = vmatmul.f32.gmra.mxu0 %v199
  %v201 = vpop.f32.mrf.mxu0
  %v202 = vadd.f32 0.0, %v201
  %v203 = vand.u32 %v128, 4294901760
  %v204 = vsub.f32 %v128, %v203
  %v205 = vand.u32 %v204, 4294901760
  %v206 = vsub.f32 %v204, %v205
  %v207 = vand.u32 %v206, 4294901760
  %208 = vmatmul.f32.gmra.mxu0 %v207
  %v209 = vpop.f32.mrf.mxu0
  %v210 = vadd.f32 0.0, %v209
  %v211 = vand.u32 %v131, 4294901760
  %v212 = vsub.f32 %v131, %v211
  %v213 = vand.u32 %v212, 4294901760
  %v214 = vsub.f32 %v212, %v213
  %v215 = vand.u32 %v214, 4294901760
  %216 = vmatmul.f32.gmra.mxu0 %v215
  %v217 = vpop.f32.mrf.mxu0
  %v218 = vadd.f32 0.0, %v217
  %219 = vdwg.mxu0
  %220 = vmatpush.msra.mxu0 0.0
  %221 = vmatpush.msra.mxu0 0.0
  %222 = vmatpush.msra.mxu0 0.0
  %223 = vmatpush.msra.mxu0 0.0
  %224 = vmatpush.msra.mxu0 0.0
  %225 = vmatpush.msra.mxu0 0.0
  %226 = vmatpush.msra.mxu0 0.0
  %227 = vmatpush.msra.mxu0 0.0
  %228 = vmatpush.msra.mxu0 0.0
  %229 = vmatpush.msra.mxu0 0.0
  %230 = vmatpush.msra.mxu0 0.0
  %231 = vmatpush.msra.mxu0 0.0
  %232 = vmatpush.msra.mxu0 0.0
  %233 = vmatpush.msra.mxu0 0.0
  %v234 = vand.u32 %v135, 4294901760
  %v235 = vsub.f32 %v135, %v234
  %v236 = vand.u32 %v235, 4294901760
  %v237 = vsub.f32 %v235, %v236
  %v238 = vand.u32 %v237, 4294901760
  %239 = vmatpush.msra.mxu0 %v238
  %v240 = vand.u32 %v106, 4294901760
  %v241 = vsub.f32 %v106, %v240
  %v242 = vand.u32 %v241, 4294901760
  %v243 = vsub.f32 %v241, %v242
  %v244 = vand.u32 %v243, 4294901760
  %245 = vmatpush.msra.mxu0 %v244
  %v246 = vand.u32 %v110, 4294901760
  %247 = vmatmul.f32.gmra.mxu0 %v246
  %v248 = vpop.f32.mrf.mxu0
  %v249 = vadd.f32 %v162, %v248
  %v250 = vand.u32 %v113, 4294901760
  %251 = vmatmul.f32.gmra.mxu0 %v250
  %v252 = vpop.f32.mrf.mxu0
  %v253 = vadd.f32 %v170, %v252
  %v254 = vand.u32 %v116, 4294901760
  %255 = vmatmul.f32.gmra.mxu0 %v254
  %v256 = vpop.f32.mrf.mxu0
  %v257 = vadd.f32 %v178, %v256
  %v258 = vand.u32 %v119, 4294901760
  %259 = vmatmul.f32.gmra.mxu0 %v258
  %v260 = vpop.f32.mrf.mxu0
  %v261 = vadd.f32 %v186, %v260
  %v262 = vand.u32 %v122, 4294901760
  %263 = vmatmul.f32.gmra.mxu0 %v262
  %v264 = vpop.f32.mrf.mxu0
  %v265 = vadd.f32 %v194, %v264
  %v266 = vand.u32 %v125, 4294901760
  %267 = vmatmul.f32.gmra.mxu0 %v266
  %v268 = vpop.f32.mrf.mxu0
  %v269 = vadd.f32 %v202, %v268
  %v270 = vand.u32 %v128, 4294901760
  %271 = vmatmul.f32.gmra.mxu0 %v270
  %v272 = vpop.f32.mrf.mxu0
  %v273 = vadd.f32 %v210, %v272
  %v274 = vand.u32 %v131, 4294901760
  %275 = vmatmul.f32.gmra.mxu0 %v274
  %v276 = vpop.f32.mrf.mxu0
  %v277 = vadd.f32 %v218, %v276
  %278 = vdwg.mxu0
  %279 = vmatpush.msra.mxu0 0.0
  %280 = vmatpush.msra.mxu0 0.0
  %281 = vmatpush.msra.mxu0 0.0
  %282 = vmatpush.msra.mxu0 0.0
  %283 = vmatpush.msra.mxu0 0.0
  %284 = vmatpush.msra.mxu0 0.0
  %285 = vmatpush.msra.mxu0 0.0
  %286 = vmatpush.msra.mxu0 0.0
  %287 = vmatpush.msra.mxu0 0.0
  %288 = vmatpush.msra.mxu0 0.0
  %289 = vmatpush.msra.mxu0 0.0
  %290 = vmatpush.msra.mxu0 0.0
  %291 = vmatpush.msra.mxu0 0.0
  %292 = vmatpush.msra.mxu0 0.0
  %v293 = vand.u32 %v135, 4294901760
  %v294 = vsub.f32 %v135, %v293
  %295 = vmatpush.msra.mxu0 %v294
  %v296 = vand.u32 %v106, 4294901760
  %v297 = vsub.f32 %v106, %v296
  %298 = vmatpush.msra.mxu0 %v297
  %v299 = vand.u32 %v110, 4294901760
  %v300 = vsub.f32 %v110, %v299
  %301 = vmatmul.f32.gmra.mxu0 %v300
  %v302 = vpop.f32.mrf.mxu0
  %v303 = vadd.f32 %v249, %v302
  %v304 = vand.u32 %v113, 4294901760
  %v305 = vsub.f32 %v113, %v304
  %306 = vmatmul.f32.gmra.mxu0 %v305
  %v307 = vpop.f32.mrf.mxu0
  %v308 = vadd.f32 %v253, %v307
  %v309 = vand.u32 %v116, 4294901760
  %v310 = vsub.f32 %v116, %v309
  %311 = vmatmul.f32.gmra.mxu0 %v310
  %v312 = vpop.f32.mrf.mxu0
  %v313 = vadd.f32 %v257, %v312
  %v314 = vand.u32 %v119, 4294901760
  %v315 = vsub.f32 %v119, %v314
  %316 = vmatmul.f32.gmra.mxu0 %v315
  %v317 = vpop.f32.mrf.mxu0
  %v318 = vadd.f32 %v261, %v317
  %v319 = vand.u32 %v122, 4294901760
  %v320 = vsub.f32 %v122, %v319
  %321 = vmatmul.f32.gmra.mxu0 %v320
  %v322 = vpop.f32.mrf.mxu0
  %v323 = vadd.f32 %v265, %v322
  %v324 = vand.u32 %v125, 4294901760
  %v325 = vsub.f32 %v125, %v324
  %326 = vmatmul.f32.gmra.mxu0 %v325
  %v327 = vpop.f32.mrf.mxu0
  %v328 = vadd.f32 %v269, %v327
  %v329 = vand.u32 %v128, 4294901760
  %v330 = vsub.f32 %v128, %v329
  %331 = vmatmul.f32.gmra.mxu0 %v330
  %v332 = vpop.f32.mrf.mxu0
  %v333 = vadd.f32 %v273, %v332
  %v334 = vand.u32 %v131, 4294901760
  %v335 = vsub.f32 %v131, %v334
  %336 = vmatmul.f32.gmra.mxu0 %v335
  %v337 = vpop.f32.mrf.mxu0
  %v338 = vadd.f32 %v277, %v337
  %339 = vdwg.mxu0
  %340 = vmatpush.msra.mxu0 0.0
  %341 = vmatpush.msra.mxu0 0.0
  %342 = vmatpush.msra.mxu0 0.0
  %343 = vmatpush.msra.mxu0 0.0
  %344 = vmatpush.msra.mxu0 0.0
  %345 = vmatpush.msra.mxu0 0.0
  %346 = vmatpush.msra.mxu0 0.0
  %347 = vmatpush.msra.mxu0 0.0
  %348 = vmatpush.msra.mxu0 0.0
  %349 = vmatpush.msra.mxu0 0.0
  %350 = vmatpush.msra.mxu0 0.0
  %351 = vmatpush.msra.mxu0 0.0
  %352 = vmatpush.msra.mxu0 0.0
  %353 = vmatpush.msra.mxu0 0.0
  %v354 = vand.u32 %v135, 4294901760
  %355 = vmatpush.msra.mxu0 %v354
  %v356 = vand.u32 %v106, 4294901760
  %357 = vmatpush.msra.mxu0 %v356
  %v358 = vand.u32 %v110, 4294901760
  %v359 = vsub.f32 %v110, %v358
  %v360 = vand.u32 %v359, 4294901760
  %361 = vmatmul.f32.gmra.mxu0 %v360
  %v362 = vpop.f32.mrf.mxu0
  %v363 = vadd.f32 %v303, %v362
  %v364 = vand.u32 %v113, 4294901760
  %v365 = vsub.f32 %v113, %v364
  %v366 = vand.u32 %v365, 4294901760
  %367 = vmatmul.f32.gmra.mxu0 %v366
  %v368 = vpop.f32.mrf.mxu0
  %v369 = vadd.f32 %v308, %v368
  %v370 = vand.u32 %v116, 4294901760
  %v371 = vsub.f32 %v116, %v370
  %v372 = vand.u32 %v371, 4294901760
  %373 = vmatmul.f32.gmra.mxu0 %v372
  %v374 = vpop.f32.mrf.mxu0
  %v375 = vadd.f32 %v313, %v374
  %v376 = vand.u32 %v119, 4294901760
  %v377 = vsub.f32 %v119, %v376
  %v378 = vand.u32 %v377, 4294901760
  %379 = vmatmul.f32.gmra.mxu0 %v378
  %v380 = vpop.f32.mrf.mxu0
  %v381 = vadd.f32 %v318, %v380
  %v382 = vand.u32 %v122, 4294901760
  %v383 = vsub.f32 %v122, %v382
  %v384 = vand.u32 %v383, 4294901760
  %385 = vmatmul.f32.gmra.mxu0 %v384
  %v386 = vpop.f32.mrf.mxu0
  %v387 = vadd.f32 %v323, %v386
  %v388 = vand.u32 %v125, 4294901760
  %v389 = vsub.f32 %v125, %v388
  %v390 = vand.u32 %v389, 4294901760
  %391 = vmatmul.f32.gmra.mxu0 %v390
  %v392 = vpop.f32.mrf.mxu0
  %v393 = vadd.f32 %v328, %v392
  %v394 = vand.u32 %v128, 4294901760
  %v395 = vsub.f32 %v128, %v394
  %v396 = vand.u32 %v395, 4294901760
  %397 = vmatmul.f32.gmra.mxu0 %v396
  %v398 = vpop.f32.mrf.mxu0
  %v399 = vadd.f32 %v333, %v398
  %v400 = vand.u32 %v131, 4294901760
  %v401 = vsub.f32 %v131, %v400
  %v402 = vand.u32 %v401, 4294901760
  %403 = vmatmul.f32.gmra.mxu0 %v402
  %v404 = vpop.f32.mrf.mxu0
  %v405 = vadd.f32 %v338, %v404
  %406 = vdwg.mxu0
  %407 = vmatpush.msra.mxu0 0.0
  %408 = vmatpush.msra.mxu0 0.0
  %409 = vmatpush.msra.mxu0 0.0
  %410 = vmatpush.msra.mxu0 0.0
  %411 = vmatpush.msra.mxu0 0.0
  %412 = vmatpush.msra.mxu0 0.0
  %413 = vmatpush.msra.mxu0 0.0
  %414 = vmatpush.msra.mxu0 0.0
  %415 = vmatpush.msra.mxu0 0.0
  %416 = vmatpush.msra.mxu0 0.0
  %417 = vmatpush.msra.mxu0 0.0
  %418 = vmatpush.msra.mxu0 0.0
  %419 = vmatpush.msra.mxu0 0.0
  %420 = vmatpush.msra.mxu0 0.0
  %v421 = vand.u32 %v135, 4294901760
  %v422 = vsub.f32 %v135, %v421
  %v423 = vand.u32 %v422, 4294901760
  %424 = vmatpush.msra.mxu0 %v423
  %v425 = vand.u32 %v106, 4294901760
  %v426 = vsub.f32 %v106, %v425
  %v427 = vand.u32 %v426, 4294901760
  %428 = vmatpush.msra.mxu0 %v427
  %v429 = vand.u32 %v110, 4294901760
  %430 = vmatmul.f32.gmra.mxu0 %v429
  %v431 = vpop.f32.mrf.mxu0
  %v432 = vadd.f32 %v363, %v431
  %v433 = vand.u32 %v113, 4294901760
  %434 = vmatmul.f32.gmra.mxu0 %v433
  %v435 = vpop.f32.mrf.mxu0
  %v436 = vadd.f32 %v369, %v435
  %v437 = vand.u32 %v116, 4294901760
  %438 = vmatmul.f32.gmra.mxu0 %v437
  %v439 = vpop.f32.mrf.mxu0
  %v440 = vadd.f32 %v375, %v439
  %v441 = vand.u32 %v119, 4294901760
  %442 = vmatmul.f32.gmra.mxu0 %v441
  %v443 = vpop.f32.mrf.mxu0
  %v444 = vadd.f32 %v381, %v443
  %v445 = vand.u32 %v122, 4294901760
  %446 = vmatmul.f32.gmra.mxu0 %v445
  %v447 = vpop.f32.mrf.mxu0
  %v448 = vadd.f32 %v387, %v447
  %v449 = vand.u32 %v125, 4294901760
  %450 = vmatmul.f32.gmra.mxu0 %v449
  %v451 = vpop.f32.mrf.mxu0
  %v452 = vadd.f32 %v393, %v451
  %v453 = vand.u32 %v128, 4294901760
  %454 = vmatmul.f32.gmra.mxu0 %v453
  %v455 = vpop.f32.mrf.mxu0
  %v456 = vadd.f32 %v399, %v455
  %v457 = vand.u32 %v131, 4294901760
  %458 = vmatmul.f32.gmra.mxu0 %v457
  %v459 = vpop.f32.mrf.mxu0
  %v460 = vadd.f32 %v405, %v459
  %461 = vdwg.mxu0
  %462 = vmatpush.msra.mxu0 0.0
  %463 = vmatpush.msra.mxu0 0.0
  %464 = vmatpush.msra.mxu0 0.0
  %465 = vmatpush.msra.mxu0 0.0
  %466 = vmatpush.msra.mxu0 0.0
  %467 = vmatpush.msra.mxu0 0.0
  %468 = vmatpush.msra.mxu0 0.0
  %469 = vmatpush.msra.mxu0 0.0
  %470 = vmatpush.msra.mxu0 0.0
  %471 = vmatpush.msra.mxu0 0.0
  %472 = vmatpush.msra.mxu0 0.0
  %473 = vmatpush.msra.mxu0 0.0
  %474 = vmatpush.msra.mxu0 0.0
  %475 = vmatpush.msra.mxu0 0.0
  %v476 = vand.u32 %v135, 4294901760
  %477 = vmatpush.msra.mxu0 %v476
  %v478 = vand.u32 %v106, 4294901760
  %479 = vmatpush.msra.mxu0 %v478
  %v480 = vand.u32 %v110, 4294901760
  %481 = vmatmul.f32.gmra.mxu0 %v480
  %v482 = vpop.f32.mrf.mxu0
  %v483 = vadd.f32 %v432, %v482
  %v484 = vand.u32 %v113, 4294901760
  %485 = vmatmul.f32.gmra.mxu0 %v484
  %v486 = vpop.f32.mrf.mxu0
  %v487 = vadd.f32 %v436, %v486
  %v488 = vand.u32 %v116, 4294901760
  %489 = vmatmul.f32.gmra.mxu0 %v488
  %v490 = vpop.f32.mrf.mxu0
  %v491 = vadd.f32 %v440, %v490
  %v492 = vand.u32 %v119, 4294901760
  %493 = vmatmul.f32.gmra.mxu0 %v492
  %v494 = vpop.f32.mrf.mxu0
  %v495 = vadd.f32 %v444, %v494
  %v496 = vand.u32 %v122, 4294901760
  %497 = vmatmul.f32.gmra.mxu0 %v496
  %v498 = vpop.f32.mrf.mxu0
  %v499 = vadd.f32 %v448, %v498
  %v500 = vand.u32 %v125, 4294901760
  %501 = vmatmul.f32.gmra.mxu0 %v500
  %v502 = vpop.f32.mrf.mxu0
  %v503 = vadd.f32 %v452, %v502
  %v504 = vand.u32 %v128, 4294901760
  %505 = vmatmul.f32.gmra.mxu0 %v504
  %v506 = vpop.f32.mrf.mxu0
  %v507 = vadd.f32 %v456, %v506
  %v508 = vand.u32 %v131, 4294901760
  %509 = vmatmul.f32.gmra.mxu0 %v508
  %v510 = vpop.f32.mrf.mxu0
  %v511 = vadd.f32 %v460, %v510
  %512 = vdwg.mxu0
  %vm513 = vcmask 64512
  %514 = vst.msk [vmem:[%s1] sm:$0xff] %vm513, %v483
  %515 = vst.msk [vmem:[%s1 + $0x8] sm:$0xff] %vm513, %v487
  %516 = vst.msk [vmem:[%s1 + $0x10] sm:$0xff] %vm513, %v491
  %517 = vst.msk [vmem:[%s1 + $0x18] sm:$0xff] %vm513, %v495
  %518 = vst.msk [vmem:[%s1 + $0x20] sm:$0xff] %vm513, %v499
  %519 = vst.msk [vmem:[%s1 + $0x28] sm:$0xff] %vm513, %v503
  %520 = vst.msk [vmem:[%s1 + $0x30] sm:$0xff] %vm513, %v507
  %521 = vst.msk [vmem:[%s1 + $0x38] sm:$0xff] %vm513, %v511
  // Predicated region
  $region6: #{tpu_custom_call.1} parent=0 // pred_check
    _
  $region7: #{tpu_custom_call.1} parent=0 // pred_check_branch
    %523 = sbr.rel (0) target = $region9
  $region8: #{tpu_custom_call.1} parent=0 // pred_region
    _
  $region9: #{tpu_custom_call.1} parent=0 // pred_fallthru
    _
  // Predicated region
  $region10: #{tpu_custom_call.1} parent=0 // pred_check
    _
  $region11: #{tpu_custom_call.1} parent=0 // pred_check_branch
    %525 = sbr.rel (0) target = $region13
  $region12: #{tpu_custom_call.1} parent=0 // pred_region
    _
  $region13: #{tpu_custom_call.1} parent=0 // pred_fallthru
    _

</llo_original>
